<compile_context>
chip_gen: v7x
topology: tpu7x:2x2x1
jax: 0.10.0
libtpu: 0.0.40
codegen_flags: <defaults>
</compile_context>

<pallas_src>
import math
import functools

import jax
import jax.numpy as jnp
from jax.experimental import pallas as pl
from jax.experimental.pallas import tpu as pltpu

KERNEL_SIZE = 5
SIGMA = 0.5
LAMBDA_GUIDE = 5.0


def gaussian_taps(kernel_size=KERNEL_SIZE, sigma=SIGMA):
    """Deterministic gaussian kernel, identical to GaussianBlurConv.create_gaussian_kernel."""
    offsets = [i - kernel_size // 2 for i in range(kernel_size)]  # [-2,-1,0,1,2] for k=5
    w = [math.exp(-0.5 * (o / sigma) ** 2) for o in offsets]
    s = sum(w)
    return tuple((o, wi / s) for o, wi in zip(offsets, w))


def _round_up(v, m):
    return ((v + m - 1) // m) * m


def _smoothing_kernel(w_ref, x_ref, t_ref, o_ref, *, offsets, s_blk, out_cols):
    # w_ref: (5, S_blk) lambda-scaled, boundary-masked weights (resident in VMEM).
    # x_ref: (TB, S_blk)   t_ref/o_ref: (TB, S) natural shape.
    x = x_ref[...]
    acc = None
    for j, d in enumerate(offsets):
        wrow = w_ref[j:j + 1, :]                                  # (1, S_blk), sublane-broadcast
        src = x if d == 0 else pltpu.roll(x, shift=(-d) % s_blk, axis=1)
        contrib = wrow * src
        acc = contrib if acc is None else acc + contrib
    if out_cols != s_blk:
        acc = acc[:, :out_cols]
    # weights were pre-scaled by lambda, so:
    #   out = lambda*blurred + (1 - lambda)*target == target + lambda*(blurred - target)
    out = acc + jnp.float32(1.0 - LAMBDA_GUIDE) * t_ref[...]
    o_ref[...] = out.astype(o_ref.dtype)


def att_variance_smoothing(x, target, block_rows=None):
    assert x.shape == target.shape and x.ndim == 2
    B, S = x.shape
    S_blk = max(128, _round_up(S, 128))

    # Only x needs a lane-dense width for the in-kernel rolls; pad content is irrelevant
    # (boundary taps are zeroed via the masked weight rows), zeros are just convenient.
    x_in = x if S_blk == S else jnp.pad(x, ((0, 0), (0, S_blk - S)))

    taps = gaussian_taps()
    offsets = tuple(d for d, _ in taps)
    col = jnp.arange(S_blk, dtype=jnp.int32)
    wrows = jnp.stack(
        [jnp.where((col + d >= 0) & (col + d < S),
                   jnp.float32(w * LAMBDA_GUIDE), jnp.float32(0.0))
         for d, w in taps],
        axis=0,
    )  # (5, S_blk) float32

    if block_rows is None:
        budget = 4 << 20                                          # ~4 MiB of x per block
        rows = max(8, ((budget // (S_blk * 4)) // 8) * 8)
        if B > 8:
            # Keep a multi-step grid: pipelined DMA + megacore sharding on v7x.
            min_steps = 4 if B >= 32 else 2
            cap = _round_up(max(8, -(-B // min_steps)), 8)
            rows = min(rows, cap)
        block_rows = min(B, rows)
    # Enforce the (8,128) sublane rule: rows multiple of 8, or equal to the full batch dim.
    if block_rows != B and block_rows % 8 != 0:
        block_rows = B if B <= 8 else max(8, (block_rows // 8) * 8)

    grid = (pl.cdiv(B, block_rows),)

    # Explicit VMEM budget: double-buffered blocks + resident weights + headroom.
    step_bytes = block_rows * 4 * (S_blk + 2 * S) + KERNEL_SIZE * S_blk * 4
    vmem_limit = int(2 * step_bytes * 1.5) + (2 << 20)
    vmem_limit = min(max(vmem_limit, 16 << 20), 48 << 20)

    kernel = functools.partial(
        _smoothing_kernel, offsets=offsets, s_blk=S_blk, out_cols=S
    )

    cost = pl.CostEstimate(
        flops=(2 * KERNEL_SIZE + 2) * B * S_blk,
        transcendentals=0,
        bytes_accessed=4 * (B * S_blk + 2 * B * S + KERNEL_SIZE * S_blk),
    )

    return pl.pallas_call(
        kernel,
        out_shape=jax.ShapeDtypeStruct((B, S), x.dtype),
        grid=grid,
        in_specs=[
            pl.BlockSpec((KERNEL_SIZE, S_blk), lambda i: (0, 0)),   # constant -> stays resident
            pl.BlockSpec((block_rows, S_blk), lambda i: (i, 0)),
            pl.BlockSpec((block_rows, S), lambda i: (i, 0)),
        ],
        out_specs=pl.BlockSpec((block_rows, S), lambda i: (i, 0)),
        compiler_params=pltpu.CompilerParams(
            dimension_semantics=("parallel",),
            vmem_limit_bytes=vmem_limit,
        ),
        cost_estimate=cost,
    )(wrows, x_in, target)


def _reference(x, target):
    """Plain-JAX reference matching the PyTorch forward."""
    taps = gaussian_taps()
    B, S = x.shape
    xp = jnp.pad(x, ((0, 0), (KERNEL_SIZE // 2, KERNEL_SIZE // 2)))
    blurred = jnp.zeros_like(x)
    for j, (_, w) in enumerate(taps):
        blurred = blurred + jnp.float32(w) * xp[:, j:j + S]
    return target + LAMBDA_GUIDE * (blurred - target)


if __name__ == "__main__":
    key = jax.random.PRNGKey(0)
    k1, k2, k3, k4, k5, k6 = jax.random.split(key, 6)

    # Case 1: lane-aligned seq length (no padding anywhere, single grid step).
    B1, S1 = 8, 128
    x1 = jax.random.normal(k1, (B1, S1), dtype=jnp.float32)
    t1 = jax.random.normal(k2, (B1, S1), dtype=jnp.float32)
    o1 = jax.block_until_ready(att_variance_smoothing(x1, t1))
    r1 = _reference(x1, t1)
    assert o1.shape == (B1, S1)
    assert jnp.allclose(o1, r1, atol=1e-5, rtol=1e-5), float(jnp.max(jnp.abs(o1 - r1)))

    # Case 2: ragged seq length — target/output at natural shape, only x padded to 128 lanes.
    B2, S2 = 4, 50
    x2 = jax.random.normal(k3, (B2, S2), dtype=jnp.float32)
    t2 = jax.random.normal(k4, (B2, S2), dtype=jnp.float32)
    o2 = jax.block_until_ready(att_variance_smoothing(x2, t2))
    r2 = _reference(x2, t2)
    assert o2.shape == (B2, S2)
    assert jnp.allclose(o2, r2, atol=1e-5, rtol=1e-5), float(jnp.max(jnp.abs(o2 - r2)))

    # Case 3: multi-step grid with a partial final batch block (exercises pipelining path).
    B3, S3 = 20, 384
    x3 = jax.random.normal(k5, (B3, S3), dtype=jnp.float32)
    t3 = jax.random.normal(k6, (B3, S3), dtype=jnp.float32)
    o3 = jax.block_until_ready(att_variance_smoothing(x3, t3))
    r3 = _reference(x3, t3)
    assert o3.shape == (B3, S3)
    assert jnp.allclose(o3, r3, atol=1e-5, rtol=1e-5), float(jnp.max(jnp.abs(o3 - r3)))

    print("KERNEL_OK")
</pallas_src>

<mosaic_0001>
module attributes {stable_mosaic.version = 11 : i64} {
  func.func @_smoothing_kernel(%arg0: i32, %arg1: memref<5x128xf32, #tpu.memory_space<vmem>>, %arg2: memref<8x128xf32, #tpu.memory_space<vmem>>, %arg3: memref<8x128xf32, #tpu.memory_space<vmem>>, %arg4: memref<8x128xf32, #tpu.memory_space<vmem>>) attributes {dimension_semantics = [#tpu.dimension_semantics<parallel>], iteration_bounds = array<i64: 1>, scalar_prefetch = 0 : i64, scratch_operands = 0 : i64, tpu.core_type = #tpu.core_type<tc>, window_params = [{pipeline_mode = #tpu.pipeline_mode<synchronous>, transform_indices = @transform_0, window_bounds = array<i64: 5, 128>}, {transform_indices = @transform_1, window_bounds = array<i64: 8, 128>}, {transform_indices = @transform_2, window_bounds = array<i64: 8, 128>}, {transform_indices = @transform_3, window_bounds = array<i64: 8, 128>}]} {
    %c0 = arith.constant 0 : index
    %c0_0 = arith.constant 0 : index
    %0 = vector.load %arg2[%c0, %c0_0] : memref<8x128xf32, #tpu.memory_space<vmem>>, vector<8x128xf32>
    %c0_1 = arith.constant 0 : index
    %c0_2 = arith.constant 0 : index
    %1 = vector.load %arg1[%c0_1, %c0_2] : memref<5x128xf32, #tpu.memory_space<vmem>>, vector<1x128xf32>
    %c2_i32 = arith.constant 2 : i32
    %2 = tpu.dynamic_rotate %0 by %c2_i32 dim 1 : vector<8x128xf32>, i32 -> vector<8x128xf32>
    %3 = vector.broadcast %1 : vector<1x128xf32> to vector<8x128xf32>
    %4 = arith.mulf %3, %2 : vector<8x128xf32>
    %c1 = arith.constant 1 : index
    %c0_3 = arith.constant 0 : index
    %5 = vector.load %arg1[%c1, %c0_3] : memref<5x128xf32, #tpu.memory_space<vmem>>, vector<1x128xf32>
    %c1_i32 = arith.constant 1 : i32
    %6 = tpu.dynamic_rotate %0 by %c1_i32 dim 1 : vector<8x128xf32>, i32 -> vector<8x128xf32>
    %7 = vector.broadcast %5 : vector<1x128xf32> to vector<8x128xf32>
    %8 = arith.mulf %7, %6 : vector<8x128xf32>
    %9 = arith.addf %4, %8 : vector<8x128xf32>
    %c2 = arith.constant 2 : index
    %c0_4 = arith.constant 0 : index
    %10 = vector.load %arg1[%c2, %c0_4] : memref<5x128xf32, #tpu.memory_space<vmem>>, vector<1x128xf32>
    %11 = vector.broadcast %10 : vector<1x128xf32> to vector<8x128xf32>
    %12 = arith.mulf %11, %0 : vector<8x128xf32>
    %13 = arith.addf %9, %12 : vector<8x128xf32>
    %c3 = arith.constant 3 : index
    %c0_5 = arith.constant 0 : index
    %14 = vector.load %arg1[%c3, %c0_5] : memref<5x128xf32, #tpu.memory_space<vmem>>, vector<1x128xf32>
    %c127_i32 = arith.constant 127 : i32
    %15 = tpu.dynamic_rotate %0 by %c127_i32 dim 1 : vector<8x128xf32>, i32 -> vector<8x128xf32>
    %16 = vector.broadcast %14 : vector<1x128xf32> to vector<8x128xf32>
    %17 = arith.mulf %16, %15 : vector<8x128xf32>
    %18 = arith.addf %13, %17 : vector<8x128xf32>
    %c4 = arith.constant 4 : index
    %c0_6 = arith.constant 0 : index
    %19 = vector.load %arg1[%c4, %c0_6] : memref<5x128xf32, #tpu.memory_space<vmem>>, vector<1x128xf32>
    %c126_i32 = arith.constant 126 : i32
    %20 = tpu.dynamic_rotate %0 by %c126_i32 dim 1 : vector<8x128xf32>, i32 -> vector<8x128xf32>
    %21 = vector.broadcast %19 : vector<1x128xf32> to vector<8x128xf32>
    %22 = arith.mulf %21, %20 : vector<8x128xf32>
    %23 = arith.addf %18, %22 : vector<8x128xf32>
    %c0_7 = arith.constant 0 : index
    %c0_8 = arith.constant 0 : index
    %24 = vector.load %arg3[%c0_7, %c0_8] : memref<8x128xf32, #tpu.memory_space<vmem>>, vector<8x128xf32>
    %cst = arith.constant -4.000000e+00 : f32
    %25 = vector.broadcast %cst : f32 to vector<8x128xf32>
    %26 = arith.mulf %25, %24 : vector<8x128xf32>
    %27 = arith.addf %23, %26 : vector<8x128xf32>
    %c0_9 = arith.constant 0 : index
    %c0_10 = arith.constant 0 : index
    %28 = vector.load %arg4[%c0_9, %c0_10] : memref<8x128xf32, #tpu.memory_space<vmem>>, vector<8x128xf32>
    tpu.vector_store %arg4[%c0_9, %c0_10], %27 {strides = array<i32>} : memref<8x128xf32, #tpu.memory_space<vmem>>, vector<8x128xf32>,
    return
  }
  func.func @transform_0(%arg0: i32) -> (i32, i32) {
    %c0_i32 = arith.constant 0 : i32
    %c0_i32_0 = arith.constant 0 : i32
    %c0_i32_1 = arith.constant 0 : i32
    return %c0_i32, %c0_i32_0 : i32, i32
  }
  func.func @transform_1(%arg0: i32) -> (i32, i32) {
    %c0_i32 = arith.constant 0 : i32
    %c0_i32_0 = arith.constant 0 : i32
    return %arg0, %c0_i32 : i32, i32
  }
  func.func @transform_2(%arg0: i32) -> (i32, i32) {
    %c0_i32 = arith.constant 0 : i32
    %c0_i32_0 = arith.constant 0 : i32
    return %arg0, %c0_i32 : i32, i32
  }
  func.func @transform_3(%arg0: i32) -> (i32, i32) {
    %c0_i32 = arith.constant 0 : i32
    %c0_i32_0 = arith.constant 0 : i32
    return %arg0, %c0_i32 : i32, i32
  }
}

</mosaic_0001>

<llo_original>
// kernel: tpu_custom_call.1
$region0: #{tpu_custom_call.1}
  #allocation0 [shape = 'u32[]', space=smem, size = 0x4, offset = 0x4, fixed_abs, tag = 'smem constant byte address 0x4 - core index']
  #allocation1 [shape = 'u32[144,128]{1,0:T(1,128)}', space=vmem, size = 0x12000, scoped, tag = 'internal scratch']
  %s0 = inlined_call_operand.hbm [shape: f32[5,128], index: 0, kind: input, shape index: {}]
  %s1 = inlined_call_operand.hbm [shape: f32[8,128], index: 1, kind: input, shape index: {}]
  %s2 = inlined_call_operand.hbm [shape: f32[8,128], index: 2, kind: input, shape index: {}]
  %s3 = inlined_call_operand.hbm [shape: f32[8,128], index: 3, kind: output, shape index: {}]
  %s4 = sld [smem:[#allocation0]]
  $region34: #{tpu_custom_call.1} parent=0
    _
  %s6 = ssub.s32 1, %s4
  %s7 = scalar_select 0, %s6, %s4
  $region1: #{tpu_custom_call.1} parent=0
    #allocation2 [shape = 'u8[4096]{0}', space=vmem, size = 0x1000, scoped, tag = 'input window, operand 0, single buffered']
    #allocation3 [shape = 's32[1]{0}', space=sflag, size = 0x4, scoped, tag = 'scoped memory for tpu_custom_call.1']
    #allocation4 [shape = 's32[1]{0}', space=sflag, size = 0x4, scoped, tag = 'scoped memory for tpu_custom_call.1']
    #allocation5 [shape = 'u8[4096]{0}', space=vmem, size = 0x1000, scoped, tag = 'input window, operand 1, single buffered']
    #allocation6 [shape = 's32[1]{0}', space=sflag, size = 0x4, scoped, tag = 'scoped memory for tpu_custom_call.1']
    #allocation7 [shape = 'u8[4096]{0}', space=vmem, size = 0x1000, scoped, tag = 'input window, operand 2, single buffered']
    #allocation8 [shape = 'u8[4096]{0}', space=vmem, size = 0x1000, scoped, tag = 'output window, operand 0, single buffered']
    %8 = vsyncpa [#allocation3], 0
    %9 = vsyncpa [#allocation6], 0
    %10 = vsyncpa [#allocation4], 0
    // Predicated region
    $region2: #{tpu_custom_call.1} parent=1 // pred_check
      _
    $region3: #{tpu_custom_call.1} parent=1 // pred_check_branch
      %12 = sbr.rel (0) target = $region5
    $region4: #{tpu_custom_call.1} parent=1 // pred_region
      %s14 = ssub.s32 128, 128
      %15 = vsyncadd [#allocation3], %s14
      %s17 = sshll.u32 [#allocation2], 4
      %s18 = int_to_ptr.vmem [resolvable:$true] %s17
      %20 = dma.hbm_to_vmem [thread:$0]  %s0, 128, %s18, [#allocation3]
    $region5: #{tpu_custom_call.1} parent=1 // pred_fallthru
      _
    // Predicated region
    $region6: #{tpu_custom_call.1} parent=1 // pred_check
      _
    $region7: #{tpu_custom_call.1} parent=1 // pred_check_branch
      %22 = sbr.rel (0) target = $region9
    $region8: #{tpu_custom_call.1} parent=1 // pred_region
      %s24 = ssub.s32 128, 128
      %25 = vsyncadd [#allocation6], %s24
      %s27 = sshll.u32 [#allocation5], 4
      %s28 = int_to_ptr.vmem [resolvable:$true] %s27
      %30 = dma.hbm_to_vmem [thread:$0]  %s1, 128, %s28, [#allocation6]
    $region9: #{tpu_custom_call.1} parent=1 // pred_fallthru
      _
    // Predicated region
    $region10: #{tpu_custom_call.1} parent=1 // pred_check
      _
    $region11: #{tpu_custom_call.1} parent=1 // pred_check_branch
      %32 = sbr.rel (0) target = $region13
    $region12: #{tpu_custom_call.1} parent=1 // pred_region
      %s34 = ssub.s32 128, 128
      %35 = vsyncadd [#allocation6], %s34
      %s37 = sshll.u32 [#allocation7], 4
      %s38 = int_to_ptr.vmem [resolvable:$true] %s37
      %40 = dma.hbm_to_vmem [thread:$0]  %s2, 128, %s38, [#allocation6]
    $region13: #{tpu_custom_call.1} parent=1 // pred_fallthru
      _
    // Predicated region
    $region14: #{tpu_custom_call.1} parent=1 // pred_check
      _
    $region15: #{tpu_custom_call.1} parent=1 // pred_check_branch
      %42 = sbr.rel (0) target = $region17
    $region16: #{tpu_custom_call.1} parent=1 // pred_region
      %43 = dma.done [#allocation3], 128
    $region17: #{tpu_custom_call.1} parent=1 // pred_fallthru
      _
    // Predicated region
    $region18: #{tpu_custom_call.1} parent=1 // pred_check
      _
    $region19: #{tpu_custom_call.1} parent=1 // pred_check_branch
      %45 = sbr.rel (0) target = $region21
    $region20: #{tpu_custom_call.1} parent=1 // pred_region
      %46 = dma.done [#allocation6], 128
    $region21: #{tpu_custom_call.1} parent=1 // pred_fallthru
      _
    // Predicated region
    $region22: #{tpu_custom_call.1} parent=1 // pred_check
      _
    $region23: #{tpu_custom_call.1} parent=1 // pred_check_branch
      %48 = sbr.rel (0) target = $region25
    $region24: #{tpu_custom_call.1} parent=1 // pred_region
      %49 = dma.done [#allocation6], 128
    $region25: #{tpu_custom_call.1} parent=1 // pred_fallthru
      _
    %v50 = vld [vmem:[#allocation5] sm:$0xff]
    %v51 = vld [vmem:[#allocation2] sm:$0x1]
    %52 = vrot.lane.b32.xlu0 %v50, 2
    %v53 = vpop.permute.xlu0 %52
    %v54 = vlaneseq
    %v55 = vshrl.u32 %v54, 7
    %v56 = vsub.s32 0, %v55
    %v57 = vrot.slane %v51, %v56
    %v58 = vmul.f32 %v57, %v53
    %v59 = vld [vmem:[#allocation2 + $0x1] sm:$0x1]
    %60 = vrot.lane.b32.xlu0 %v50, 1
    %v61 = vpop.permute.xlu0 %60
    %v62 = vlaneseq
    %v63 = vshrl.u32 %v62, 7
    %v64 = vsub.s32 0, %v63
    %v65 = vrot.slane %v59, %v64
    %v66 = vmul.f32 %v65, %v61
    %v67 = vadd.f32 %v58, %v66
    %v68 = vld [vmem:[#allocation2 + $0x2] sm:$0x1]
    %v69 = vlaneseq
    %v70 = vshrl.u32 %v69, 7
    %v71 = vsub.s32 0, %v70
    %v72 = vrot.slane %v68, %v71
    %v73 = vmul.f32 %v72, %v50
    %v74 = vadd.f32 %v67, %v73
    %v75 = vld [vmem:[#allocation2 + $0x3] sm:$0x1]
    %76 = vrot.lane.b32.xlu0 %v50, 127
    %v77 = vpop.permute.xlu0 %76
    %v78 = vlaneseq
    %v79 = vshrl.u32 %v78, 7
    %v80 = vsub.s32 0, %v79
    %v81 = vrot.slane %v75, %v80
    %v82 = vmul.f32 %v81, %v77
    %v83 = vadd.f32 %v74, %v82
    %v84 = vld [vmem:[#allocation2 + $0x4] sm:$0x1]
    %85 = vrot.lane.b32.xlu0 %v50, 126
    %v86 = vpop.permute.xlu0 %85
    %v87 = vlaneseq
    %v88 = vshrl.u32 %v87, 7
    %v89 = vsub.s32 0, %v88
    %v90 = vrot.slane %v84, %v89
    %v91 = vmul.f32 %v90, %v86
    %v92 = vadd.f32 %v83, %v91
    %v93 = vld [vmem:[#allocation7] sm:$0xff]
    %v94 = vmul.f32 %v93, -4.0
    %v95 = vadd.f32 %v92, %v94
    %96 = vst [vmem:[#allocation8] sm:$0xff] %v95
    // Predicated region
    $region26: #{tpu_custom_call.1} parent=1 // pred_check
      _
    $region27: #{tpu_custom_call.1} parent=1 // pred_check_branch
      %98 = sbr.rel (0) target = $region29
    $region28: #{tpu_custom_call.1} parent=1 // pred_region
      %s100 = ssub.s32 128, 128
      %101 = vsyncadd [#allocation4], %s100
      %s103 = sshll.u32 [#allocation8], 4
      %s104 = int_to_ptr.vmem [resolvable:$true] %s103
      %106 = dma.vmem_to_hbm [thread:$0]  %s104, 128, %s3, [#allocation4]
    $region29: #{tpu_custom_call.1} parent=1 // pred_fallthru
      _
    // Predicated region
    $region30: #{tpu_custom_call.1} parent=1 // pred_check
      _
    $region31: #{tpu_custom_call.1} parent=1 // pred_check_branch
      %108 = sbr.rel (0) target = $region33
    $region32: #{tpu_custom_call.1} parent=1 // pred_region
      %109 = dma.done [#allocation4], 128
    $region33: #{tpu_custom_call.1} parent=1 // pred_fallthru
      _
    %110 = vsyncpa [#allocation3], 1
    %111 = vsyncpa [#allocation6], 1
    %112 = vsyncpa [#allocation4], 1

</llo_original>
